<compile_context>
chip_gen: v7x
topology: tpu7x:2x2x1
jax: 0.10.0
libtpu: 0.0.40
codegen_flags: <defaults>
</compile_context>

<pallas_src>
import jax
import jax.numpy as jnp
from jax.experimental import pallas as pl
from jax.experimental.pallas import tpu as pltpu

_LANES = 128
_SUBLANES = 8


def _mean_complex_kernel(re_ref, im_ref, o_ref):
    # out = (Re(z) + Im(z)) / 2, element-wise.
    o_ref[...] = (re_ref[...] + im_ref[...]) * jnp.float32(0.5)


def _default_tile_rows():
    """Per-step tile height (rows of 128 f32 lanes) tuned per TPU generation."""
    try:
        kind = jax.devices()[0].device_kind.lower()
    except Exception:
        return 2048
    if "v7" in kind:
        # v7x: ~3.2 TB/s HBM -> several MiB per step to hide the fixed per-step
        # overhead.  4096x128 f32: 2 in + 1 out, double buffered ~= 12 MiB,
        # comfortably under the 32 MiB scoped VMEM default.
        return 4096
    # v5e / v6e: 2048x128 f32 (6 MiB double buffered) already sits at the
    # large-tile HBM roofline and fits v5e's 16 MiB scoped VMEM default.
    return 2048


def mean_complex(z, *, max_tile_rows=None):
    """Pallas equivalent of torch.view_as_real(z).mean(dim=-1)."""
    orig_shape = z.shape
    numel = 1
    for d in orig_shape:
        numel *= int(d)
    if numel == 0:
        return jnp.zeros(orig_shape, jnp.float32)

    if max_tile_rows is None:
        max_tile_rows = _default_tile_rows()

    # The only unavoidable pre-pass: split the complex input into f32 planes.
    # Under jit, the flatten + (rare, <=1023-element) pad fuse into this same
    # fusion, so they add no extra HBM pass.
    re = jnp.real(z).astype(jnp.float32).reshape(-1)
    im = jnp.imag(z).astype(jnp.float32).reshape(-1)

    # Pad only to the next 8-row (sublane) boundary; ragged last grid step is
    # handled by Pallas at the block boundary.
    rows = pl.cdiv(numel, _LANES)
    rows8 = pl.cdiv(rows, _SUBLANES) * _SUBLANES
    pad = rows8 * _LANES - numel
    if pad:
        re = jnp.pad(re, (0, pad))
        im = jnp.pad(im, (0, pad))
    re2 = re.reshape(rows8, _LANES)
    im2 = im.reshape(rows8, _LANES)

    # Largest allowed tile, but split into >= 2 grid steps whenever possible so
    # the "parallel" axis can be sharded across both TensorCores on megacore
    # chips (v5e/v6e single-TC chips are unaffected).
    tile_rows = min(max_tile_rows, rows8)
    if rows8 >= 2 * _SUBLANES:
        half = pl.cdiv(pl.cdiv(rows8, 2), _SUBLANES) * _SUBLANES
        tile_rows = min(tile_rows, half)
    grid = (pl.cdiv(rows8, tile_rows),)

    out = pl.pallas_call(
        _mean_complex_kernel,
        out_shape=jax.ShapeDtypeStruct((rows8, _LANES), jnp.float32),
        grid_spec=pltpu.PrefetchScalarGridSpec(
            num_scalar_prefetch=0,
            grid=grid,
            in_specs=[
                pl.BlockSpec((tile_rows, _LANES), lambda i: (i, 0)),
                pl.BlockSpec((tile_rows, _LANES), lambda i: (i, 0)),
            ],
            out_specs=pl.BlockSpec((tile_rows, _LANES), lambda i: (i, 0)),
        ),
        compiler_params=pltpu.CompilerParams(
            dimension_semantics=("parallel",),
        ),
        cost_estimate=pl.CostEstimate(
            flops=2 * numel,
            transcendentals=0,
            bytes_accessed=3 * 4 * numel,  # 2 f32 reads + 1 f32 write per elem
        ),
    )(re2, im2)

    out_flat = out.reshape(-1)
    if pad:  # only for sizes not a multiple of 8*128
        out_flat = out_flat[:numel]
    return out_flat.reshape(orig_shape)


def _reference(z):
    # torch.view_as_real(z).mean(dim=-1) == (Re(z) + Im(z)) / 2
    return (jnp.real(z).astype(jnp.float32) + jnp.imag(z).astype(jnp.float32)) * 0.5


if __name__ == "__main__":
    key = jax.random.PRNGKey(0)
    kr, ki = jax.random.split(key)
    shape = (2, 4, 16, 16)
    zr = jax.random.normal(kr, shape, dtype=jnp.float32)
    zi = jax.random.normal(ki, shape, dtype=jnp.float32)
    z = jax.lax.complex(zr, zi)  # complex64

    fn = jax.jit(mean_complex)
    out = jax.block_until_ready(fn(z))

    ref = _reference(z)
    assert out.shape == z.shape, (out.shape, z.shape)
    assert out.dtype == jnp.float32, out.dtype
    assert jnp.allclose(out, ref, atol=1e-6, rtol=1e-6), (out, ref)
    print("KERNEL_OK")
</pallas_src>

<mosaic_0001>
module attributes {stable_mosaic.version = 11 : i64} {
  func.func @_mean_complex_kernel(%arg0: i32, %arg1: memref<8x128xf32, #tpu.memory_space<vmem>>, %arg2: memref<8x128xf32, #tpu.memory_space<vmem>>, %arg3: memref<8x128xf32, #tpu.memory_space<vmem>>) attributes {dimension_semantics = [#tpu.dimension_semantics<parallel>], iteration_bounds = array<i64: 2>, scalar_prefetch = 0 : i64, scratch_operands = 0 : i64, tpu.core_type = #tpu.core_type<tc>, window_params = [{transform_indices = @transform_0, window_bounds = array<i64: 8, 128>}, {transform_indices = @transform_1, window_bounds = array<i64: 8, 128>}, {transform_indices = @transform_2, window_bounds = array<i64: 8, 128>}]} {
    %c0 = arith.constant 0 : index
    %c0_0 = arith.constant 0 : index
    %0 = vector.load %arg1[%c0, %c0_0] : memref<8x128xf32, #tpu.memory_space<vmem>>, vector<8x128xf32>
    %c0_1 = arith.constant 0 : index
    %c0_2 = arith.constant 0 : index
    %1 = vector.load %arg2[%c0_1, %c0_2] : memref<8x128xf32, #tpu.memory_space<vmem>>, vector<8x128xf32>
    %2 = arith.addf %0, %1 : vector<8x128xf32>
    %cst = arith.constant 5.000000e-01 : f32
    %3 = vector.broadcast %cst : f32 to vector<8x128xf32>
    %4 = arith.mulf %2, %3 : vector<8x128xf32>
    %c0_3 = arith.constant 0 : index
    %c0_4 = arith.constant 0 : index
    %5 = vector.load %arg3[%c0_3, %c0_4] : memref<8x128xf32, #tpu.memory_space<vmem>>, vector<8x128xf32>
    tpu.vector_store %arg3[%c0_3, %c0_4], %4 {strides = array<i32>} : memref<8x128xf32, #tpu.memory_space<vmem>>, vector<8x128xf32>,
    return
  }
  func.func @transform_0(%arg0: i32) -> (i32, i32) {
    %c0_i32 = arith.constant 0 : i32
    %c0_i32_0 = arith.constant 0 : i32
    return %arg0, %c0_i32 : i32, i32
  }
  func.func @transform_1(%arg0: i32) -> (i32, i32) {
    %c0_i32 = arith.constant 0 : i32
    %c0_i32_0 = arith.constant 0 : i32
    return %arg0, %c0_i32 : i32, i32
  }
  func.func @transform_2(%arg0: i32) -> (i32, i32) {
    %c0_i32 = arith.constant 0 : i32
    %c0_i32_0 = arith.constant 0 : i32
    return %arg0, %c0_i32 : i32, i32
  }
}

</mosaic_0001>

<llo_original>
// kernel: custom-call.1
$region0: #{custom-call.1}
  %s0 = inlined_call_operand.hbm [shape: c64[2,4,16,16], index: 0, kind: input, shape index: {}]
  %s1 = inlined_call_operand.vmem [shape: f32[2,4,16,16], index: 1, kind: output, shape index: {}]
  %s2 = scalar_lea.hbm %s0, 2048
  $region1: #{custom-call.1} parent=0
    #allocation0 [shape = 's32[1]{0}', space=sflag, size = 0x4, scoped, tag = 'scoped memory for custom-call.1']
    %3 = vsyncpa [#allocation0], 0
    %s4 = sshll.u32 %s1, 4
    %s5 = int_to_ptr.vmem [resolvable:$true] %s4
    %7 = dma.hbm_to_vmem [thread:$0]  %s2, 2048, %s5, [#allocation0]
    %8 = dma.done [#allocation0], 2048
    %9 = vsyncpa [#allocation0], 1

// kernel: custom-call
$region0: #{custom-call}
  %s0 = inlined_call_operand.hbm [shape: c64[2,4,16,16], index: 0, kind: input, shape index: {}]
  %s1 = inlined_call_operand.vmem [shape: f32[2,4,16,16], index: 1, kind: output, shape index: {}]
  $region1: #{custom-call} parent=0
    #allocation0 [shape = 's32[1]{0}', space=sflag, size = 0x4, scoped, tag = 'scoped memory for custom-call']
    %2 = vsyncpa [#allocation0], 0
    %s3 = sshll.u32 %s1, 4
    %s4 = int_to_ptr.vmem [resolvable:$true] %s3
    %6 = dma.hbm_to_vmem [thread:$0]  %s0, 2048, %s4, [#allocation0]
    %7 = dma.done [#allocation0], 2048
    %8 = vsyncpa [#allocation0], 1

// kernel: mean_complex.1
$region0: #{mean_complex.1}
  #allocation0 [shape = 'u32[]', space=smem, size = 0x4, offset = 0x4, fixed_abs, tag = 'smem constant byte address 0x4 - core index']
  #allocation1 [shape = 'u32[144,128]{1,0:T(1,128)}', space=vmem, size = 0x12000, scoped, tag = 'internal scratch']
  %s0 = inlined_call_operand.vmem [shape: f32[16,128], index: 0, kind: input, shape index: {}]
  %s1 = inlined_call_operand.vmem [shape: f32[16,128], index: 1, kind: input, shape index: {}]
  %s2 = inlined_call_operand.vmem [shape: f32[16,128], index: 2, kind: output, shape index: {}]
  %s3 = sld [smem:[#allocation0]]
  $region41: #{mean_complex.1} parent=0
    _
  %s5 = ssub.s32 1, %s3
  %s6 = scalar_select 0, %s5, %s3
  loop: start=0, step=1, limit=4
  $region2: #{mean_complex.1} parent=0 // loop_pre_header
    _
  $region3: #{mean_complex.1} parent=0 // loop_header
    %s8 = sphi 0, %s12
    %p9 = scmp.ge.s32.totalorder %s8, 4
    %s18 = sphi 0, %s20
    %s21 = sphi 0, %s18
    %s22 = sphi 0, %s21
    %s38 = sphi 0, %s22
    %s44 = sphi 0, %s46
    %s47 = sphi 0, %s44
    %s48 = sphi 0, %s47
    %s64 = sphi 0, %s48
    %s70 = sphi 0, %s72
    %s73 = sphi 0, %s70
    %s74 = sphi 0, %s73
    %s90 = sphi 0, %s74
  $region4: #{mean_complex.1} parent=0 // loop_header_branch
    %11 = sbr.rel (%p9) target = $region8
  $region5: #{mean_complex.1} parent=0 // loop_body
    %s13 = ssub.s32 %s8, 1
    %s14 = ssub.s32 %s8, 2
    %s15 = sadd.s32 %s8, 1
    %s16 = ssub.s32 %s8, %s15
    %p17 = scmp.eq.s32.totalorder %s16, 0
    %s19 = sadd.s32 %s18, 1
    %s20 = scalar_select %p17, %s18, %s19
    %p23 = pneg %p17
    %p24 = scmp.eq.s32.totalorder %s8, 1
    %p25 = por %p23, %p24
    %p26 = scmp.ne.s32.totalorder %s18, %s21
    %p27 = scmp.eq.s32.totalorder %s8, 0
    %p28 = por %p26, %p27
    %p29 = scmp.ne.s32.totalorder %s18, %s21
    %p30 = scmp.eq.s32.totalorder %s13, 1
    %p31 = por %p29, %p30
    %p32 = scmp.ne.s32.totalorder %s21, %s22
    %p33 = scmp.eq.s32.totalorder %s13, 0
    %p34 = por %p32, %p33
    %p35 = scmp.ne.s32.totalorder %s21, %s22
    %p36 = scmp.eq.s32.totalorder %s14, 1
    %p37 = por %p35, %p36
    %p39 = scmp.ne.s32.totalorder %s22, %s38
    %p40 = scmp.eq.s32.totalorder %s14, 0
    %p41 = por %p39, %p40
    %s42 = ssub.s32 %s8, %s15
    %p43 = scmp.eq.s32.totalorder %s42, 0
    %s45 = sadd.s32 %s44, 1
    %s46 = scalar_select %p43, %s44, %s45
    %p49 = pneg %p43
    %p50 = scmp.eq.s32.totalorder %s8, 1
    %p51 = por %p49, %p50
    %p52 = scmp.ne.s32.totalorder %s44, %s47
    %p53 = scmp.eq.s32.totalorder %s8, 0
    %p54 = por %p52, %p53
    %p55 = scmp.ne.s32.totalorder %s44, %s47
    %p56 = scmp.eq.s32.totalorder %s13, 1
    %p57 = por %p55, %p56
    %p58 = scmp.ne.s32.totalorder %s47, %s48
    %p59 = scmp.eq.s32.totalorder %s13, 0
    %p60 = por %p58, %p59
    %p61 = scmp.ne.s32.totalorder %s47, %s48
    %p62 = scmp.eq.s32.totalorder %s14, 1
    %p63 = por %p61, %p62
    %p65 = scmp.ne.s32.totalorder %s48, %s64
    %p66 = scmp.eq.s32.totalorder %s14, 0
    %p67 = por %p65, %p66
    %s68 = ssub.s32 %s8, %s15
    %p69 = scmp.eq.s32.totalorder %s68, 0
    %s71 = sadd.s32 %s70, 1
    %s72 = scalar_select %p69, %s70, %s71
    %p75 = pneg %p69
    %p76 = scmp.eq.s32.totalorder %s8, 1
    %p77 = por %p75, %p76
    %p78 = scmp.ne.s32.totalorder %s70, %s73
    %p79 = scmp.eq.s32.totalorder %s8, 0
    %p80 = por %p78, %p79
    %p81 = scmp.ne.s32.totalorder %s70, %s73
    %p82 = scmp.eq.s32.totalorder %s13, 1
    %p83 = por %p81, %p82
    %p84 = scmp.ne.s32.totalorder %s73, %s74
    %p85 = scmp.eq.s32.totalorder %s13, 0
    %p86 = por %p84, %p85
    %p87 = scmp.ne.s32.totalorder %s73, %s74
    %p88 = scmp.eq.s32.totalorder %s14, 1
    %p89 = por %p87, %p88
    %p91 = scmp.ne.s32.totalorder %s74, %s90
    %p92 = scmp.eq.s32.totalorder %s14, 0
    %p93 = por %p91, %p92
    %p94 = scmp.le.s32.totalorder 1, %s8
    %p95 = scmp.lt.s32.totalorder %s8, 3
    %p96 = pnand %p94, %p95
    %p97 = pneg %p96
    // Predicated region
    $region9: #{mean_complex.1} parent=5 // pred_check
      _
    $region10: #{mean_complex.1} parent=5 // pred_check_branch
      %99 = sbr.rel (%p96) target = $region12
    $region11: #{mean_complex.1} parent=5 // pred_region
      %s100 = ssub.s32 %s8, 1
    $region12: #{mean_complex.1} parent=5 // pred_fallthru
      _
    %p101 = scmp.lt.s32.totalorder %s8, 2
    // Predicated region
    $region13: #{mean_complex.1} parent=5 // pred_check
      %p102 = pneg %p101
    $region14: #{mean_complex.1} parent=5 // pred_check_branch
      %104 = sbr.rel (%p102) target = $region16
    $region15: #{mean_complex.1} parent=5 // pred_region
      // Predicated region
      $region17: #{mean_complex.1} parent=15 // pred_check
        %p105 = pneg %p28
      $region18: #{mean_complex.1} parent=15 // pred_check_branch
        %107 = sbr.rel (%p105) target = $region20
      $region19: #{mean_complex.1} parent=15 // pred_region
        %p108 = scmp.lt.s32.totalorder %s8, 1
        %s109 = scalar_select %p108, %s8, 1
        %s110 = smul.addr %s109, 8
        %s111 = scalar_lea.vmem %s0, %s110
      $region20: #{mean_complex.1} parent=15 // pred_fallthru
        _
      // Predicated region
      $region21: #{mean_complex.1} parent=15 // pred_check
        %p112 = pneg %p54
      $region22: #{mean_complex.1} parent=15 // pred_check_branch
        %114 = sbr.rel (%p112) target = $region24
      $region23: #{mean_complex.1} parent=15 // pred_region
        %p115 = scmp.lt.s32.totalorder %s8, 1
        %s116 = scalar_select %p115, %s8, 1
        %s117 = smul.addr %s116, 8
        %s118 = scalar_lea.vmem %s1, %s117
      $region24: #{mean_complex.1} parent=15 // pred_fallthru
        _
    $region16: #{mean_complex.1} parent=5 // pred_fallthru
      _
    %p119 = scmp.le.s32.totalorder 1, %s8
    %p120 = scmp.lt.s32.totalorder %s8, 3
    %p121 = pnand %p119, %p120
    %p122 = pneg %p121
    // Predicated region
    $region25: #{mean_complex.1} parent=5 // pred_check
      _
    $region26: #{mean_complex.1} parent=5 // pred_check_branch
      %124 = sbr.rel (%p121) target = $region28
    $region27: #{mean_complex.1} parent=5 // pred_region
      %s125 = ssub.s32 %s8, 1
      %p126 = scmp.lt.s32.totalorder %s13, 1
      %s127 = scalar_select %p126, %s13, 1
      %s128 = smul.addr %s127, 8
      %s129 = scalar_lea.vmem %s0, %s128
      %p130 = pneg %p34
      %p131 = pneg %p31
      %p132 = scmp.lt.s32.totalorder %s13, 1
      %s133 = scalar_select %p132, %s13, 1
      %s134 = smul.addr %s133, 8
      %s135 = scalar_lea.vmem %s1, %s134
      %p136 = pneg %p60
      %p137 = pneg %p57
      %p138 = pneg %p86
      %p139 = pneg %p83
      %p140 = scmp.lt.s32.totalorder %s13, 1
      %s141 = scalar_select %p140, %s13, 1
      %s142 = smul.addr %s141, 8
      %s143 = scalar_lea.vmem %s2, %s142
      %p144 = scmp.lt.s32.totalorder %s13, 1
      %s145 = scalar_select %p144, %s13, 1
      %s146 = smul.addr %s145, 8
      %s147 = scalar_lea.vmem %s0, %s146
      %p148 = scmp.lt.s32.totalorder %s13, 1
      %s149 = scalar_select %p148, %s13, 1
      %s150 = smul.addr %s149, 8
      %s151 = scalar_lea.vmem %s1, %s150
      %p152 = scmp.lt.s32.totalorder %s13, 1
      %s153 = scalar_select %p152, %s13, 1
      %s154 = smul.addr %s153, 8
      %s155 = scalar_lea.vmem %s2, %s154
      %v156 = vld [vmem:[%s147] sm:$0xff]
      %v157 = vld [vmem:[%s151] sm:$0xff]
      %v158 = vadd.f32 %v156, %v157
      %v159 = vmul.f32 %v158, 0.5
      %160 = vst [vmem:[%s155] sm:$0xff] %v159
      %p161 = scmp.lt.s32.totalorder %s13, 1
      %s162 = scalar_select %p161, %s13, 1
      %s163 = smul.addr %s162, 8
      %s164 = scalar_lea.vmem %s2, %s163
      // Predicated region
      $region29: #{mean_complex.1} parent=27 // pred_check
        %p165 = pneg %p83
      $region30: #{mean_complex.1} parent=27 // pred_check_branch
        %167 = sbr.rel (%p165) target = $region32
      $region31: #{mean_complex.1} parent=27 // pred_region
        _
      $region32: #{mean_complex.1} parent=27 // pred_fallthru
        _
    $region28: #{mean_complex.1} parent=5 // pred_fallthru
      _
    %p168 = scmp.le.s32.totalorder 2, %s8
    // Predicated region
    $region33: #{mean_complex.1} parent=5 // pred_check
      %p169 = pneg %p168
    $region34: #{mean_complex.1} parent=5 // pred_check_branch
      %171 = sbr.rel (%p169) target = $region36
    $region35: #{mean_complex.1} parent=5 // pred_region
      %s172 = ssub.s32 %s8, 2
      // Predicated region
      $region37: #{mean_complex.1} parent=35 // pred_check
        %p173 = pneg %p89
      $region38: #{mean_complex.1} parent=35 // pred_check_branch
        %175 = sbr.rel (%p173) target = $region40
      $region39: #{mean_complex.1} parent=35 // pred_region
        %p176 = scmp.lt.s32.totalorder %s14, 1
        %s177 = scalar_select %p176, %s14, 1
        %s178 = smul.addr %s177, 8
        %s179 = scalar_lea.vmem %s2, %s178
      $region40: #{mean_complex.1} parent=35 // pred_fallthru
        _
    $region36: #{mean_complex.1} parent=5 // pred_fallthru
      _
  $region6: #{mean_complex.1} parent=0 // loop_footer
    %s12 = sadd.s32 1, %s8
  $region7: #{mean_complex.1} parent=0 // loop_footer_branch
    %7 = sbr.rel target = $region3
  $region8: #{mean_complex.1} parent=0 // loop_exit
    _

</llo_original>
